<compile_context>
chip_gen: v5e
topology: v5e:2x2
jax: 0.10.0
libtpu: 0.0.40
codegen_flags: <defaults>
</compile_context>

<pallas_src>
import functools

import jax
import jax.numpy as jnp
from jax.experimental import pallas as pl
from jax.experimental.pallas import tpu as pltpu

_MIB = 1024 * 1024


def _layernorm_kernel(x_ref, w_ref, b_ref, o_ref, *, eps):
    x = x_ref[...].astype(jnp.float32)                       # (rows_blk, H)
    h = x.shape[-1]

    mean = jnp.mean(x, axis=-1, keepdims=True)                # (rows_blk, 1)
    diff = x - mean                                           # reused for var & output
    # two-pass unbiased variance (Bessel's correction), matching torch.std;
    # kept as sum-of-squared-deviations to avoid cancellation issues.
    var = jnp.sum(diff * diff, axis=-1, keepdims=True) / jnp.float32(h - 1)
    std = jnp.sqrt(var)

    # per-row exact reciprocal on the (rows_blk, 1) column; the full tile only
    # sees multiplies/adds (VALU), never a divide.
    inv = 1.0 / (std + jnp.float32(eps))                      # (rows_blk, 1)

    out = (diff * inv) * w_ref[...] + b_ref[...]              # w/b already f32
    o_ref[...] = out.astype(o_ref.dtype)


def _vmem_capacity_bytes():
    """Physical per-core VMEM; conservative 64 MiB (v7x) fallback."""
    try:
        cap = getattr(pltpu.get_tpu_info(), "vmem_capacity_bytes", None)
        if cap:
            return int(cap)
    except Exception:
        pass
    return 64 * _MIB


def _sublane_multiple(itemsize):
    # sub-32-bit dtypes pack along sublanes: f32 -> 8, bf16 -> 16, int8/fp8 -> 32
    return max(8, 32 // max(int(itemsize), 1))


def _choose_block_rows(rows, hidden, itemsize, vmem_budget_bytes):
    """Pick a row-tile size:
       - bytes-based cap: aim for >= ~8 MiB of input per tile (or 1024 rows,
         whichever is larger) so the mem-bound kernel amortizes per-step cost,
       - kept under the per-generation VMEM budget (double-buffered in/out
         tiles + f32 intermediates),
       - sublane-aligned for the input dtype,
       - shrunk so the grid has >= 2 steps when there are enough rows to split
         (v7x megacore sharding + DMA/compute overlap)."""
    sublane = _sublane_multiple(itemsize)
    # 2 buffers x (input tile + output tile) in native dtype + ~3 f32 intermediates
    bytes_per_row = 4 * hidden * itemsize + 3 * hidden * 4
    max_rows_vmem = max(sublane, vmem_budget_bytes // max(bytes_per_row, 1))
    cap_rows = max(1024, (8 * _MIB) // max(hidden * itemsize, 1))
    block_rows = int(min(max_rows_vmem, cap_rows))
    if block_rows >= sublane:
        block_rows = (block_rows // sublane) * sublane        # stay inside VMEM budget
    # guarantee >= 2 grid steps when there are enough rows to meaningfully split
    if block_rows >= rows and rows > 2 * sublane:
        half = -(-rows // 2)                                   # ceil(rows / 2)
        half = -(-half // sublane) * sublane                   # round up to sublane mult
        block_rows = min(block_rows, half)
    return max(1, min(block_rows, max(rows, 1)))


def layer_norm(x, weight, bias, *, eps=1e-12, block_rows=None,
               vmem_limit_bytes=None):
    """LayerNorm over the last axis, matching the PyTorch module's forward."""
    orig_shape = x.shape
    hidden = orig_shape[-1]
    x2 = x.reshape(-1, hidden)                                # (rows, H)
    rows = x2.shape[0]

    if vmem_limit_bytes is None:
        # ~70% of physical VMEM: ~44 MiB on v7x (64 MiB/TC), ~90 MiB on v5e/v6e.
        vmem_limit_bytes = int(_vmem_capacity_bytes() * 0.70)
    if block_rows is None:
        budget = max(int(vmem_limit_bytes) - 4 * _MIB, 8 * _MIB)
        block_rows = _choose_block_rows(rows, hidden, x2.dtype.itemsize, budget)

    # weight/bias blocks are grid-resident; pre-cast to f32 once here.
    w2 = weight.reshape(1, hidden).astype(jnp.float32)
    b2 = bias.reshape(1, hidden).astype(jnp.float32)

    kernel = functools.partial(_layernorm_kernel, eps=eps)

    # TODO(synk): packed-rows fast path for H < 128 (pack k = 128 // H rows per
    # 128-lane vector with segmented reductions) is not implemented; narrow
    # hidden sizes use masked lane stores and run ~4x below the lane-dense rate.
    out = pl.pallas_call(
        kernel,
        out_shape=jax.ShapeDtypeStruct((rows, hidden), x.dtype),
        grid_spec=pltpu.PrefetchScalarGridSpec(
            num_scalar_prefetch=0,
            grid=(pl.cdiv(rows, block_rows),),                # ragged last block OK
            in_specs=[
                pl.BlockSpec((block_rows, hidden), lambda i: (i, 0)),
                pl.BlockSpec((1, hidden), lambda i: (0, 0)),
                pl.BlockSpec((1, hidden), lambda i: (0, 0)),
            ],
            out_specs=pl.BlockSpec((block_rows, hidden), lambda i: (i, 0)),
        ),
        compiler_params=pltpu.CompilerParams(
            dimension_semantics=("parallel",),                # megacore split on v7x
            vmem_limit_bytes=int(vmem_limit_bytes),
        ),
    )(x2, w2, b2)

    return out.reshape(orig_shape)


def _reference(x, weight, bias, eps):
    mean = jnp.mean(x, axis=-1, keepdims=True)
    std = jnp.std(x, axis=-1, keepdims=True, ddof=1)          # unbiased, like torch
    return weight * ((x - mean) / (std + eps)) + bias


if __name__ == "__main__":
    key = jax.random.PRNGKey(0)
    B, S, H = 2, 8, 32
    x = jax.random.normal(key, (B, S, H), dtype=jnp.float32)

    # deterministic parameter init, same as the module's __init__
    weight = jnp.ones((H,), dtype=jnp.float32)
    bias = jnp.zeros((H,), dtype=jnp.float32)

    out = jax.block_until_ready(layer_norm(x, weight, bias, eps=1e-12))
    ref = _reference(x, weight, bias, 1e-12)
    assert jnp.allclose(out, ref, atol=1e-5, rtol=1e-5), "mismatch vs reference"

    # ragged (non-multiple-of-block_rows) path: rows = 15, tile = 8
    x2 = jax.random.normal(jax.random.PRNGKey(1), (3, 5, H), dtype=jnp.float32)
    out2 = jax.block_until_ready(layer_norm(x2, weight, bias, eps=1e-12, block_rows=8))
    ref2 = _reference(x2, weight, bias, 1e-12)
    assert jnp.allclose(out2, ref2, atol=1e-5, rtol=1e-5), "ragged-block mismatch"

    # lane-dense hidden + auto-split >= 2-step grid path (rows = 512, H = 256)
    H3 = 256
    x3 = jax.random.normal(jax.random.PRNGKey(2), (64, 8, H3), dtype=jnp.float32)
    w3 = jnp.ones((H3,), dtype=jnp.float32)
    b3 = jnp.zeros((H3,), dtype=jnp.float32)
    out3 = jax.block_until_ready(layer_norm(x3, w3, b3, eps=1e-12))
    ref3 = _reference(x3, w3, b3, 1e-12)
    assert jnp.allclose(out3, ref3, atol=1e-5, rtol=1e-5), "multi-step-grid mismatch"

    print("KERNEL_OK")
</pallas_src>

<mosaic_0001>
module attributes {stable_mosaic.version = 11 : i64} {
  func.func @_layernorm_kernel(%arg0: i32, %arg1: memref<16x32xf32, #tpu.memory_space<vmem>>, %arg2: memref<1x32xf32, #tpu.memory_space<vmem>>, %arg3: memref<1x32xf32, #tpu.memory_space<vmem>>, %arg4: memref<16x32xf32, #tpu.memory_space<vmem>>) attributes {dimension_semantics = [#tpu.dimension_semantics<parallel>], iteration_bounds = array<i64: 1>, scalar_prefetch = 0 : i64, scratch_operands = 0 : i64, tpu.core_type = #tpu.core_type<tc>, window_params = [{transform_indices = @transform_0, window_bounds = array<i64: 16, 32>}, {pipeline_mode = #tpu.pipeline_mode<synchronous>, transform_indices = @transform_1, window_bounds = array<i64: 1, 32>}, {pipeline_mode = #tpu.pipeline_mode<synchronous>, transform_indices = @transform_2, window_bounds = array<i64: 1, 32>}, {transform_indices = @transform_3, window_bounds = array<i64: 16, 32>}]} {
    %c0 = arith.constant 0 : index
    %c0_0 = arith.constant 0 : index
    %0 = vector.load %arg1[%c0, %c0_0] : memref<16x32xf32, #tpu.memory_space<vmem>>, vector<16x32xf32>
    %cst = arith.constant dense<0.000000e+00> : vector<16xf32>
    %1 = vector.multi_reduction <add>, %0, %cst [1] : vector<16x32xf32> to vector<16xf32>
    %2 = vector.shape_cast %1 : vector<16xf32> to vector<16x1xf32>
    %cst_1 = arith.constant 3.200000e+01 : f32
    %3 = vector.broadcast %cst_1 : f32 to vector<16x1xf32>
    %4 = arith.divf %2, %3 : vector<16x1xf32>
    %5 = vector.broadcast %4 : vector<16x1xf32> to vector<16x32xf32>
    %6 = arith.subf %0, %5 : vector<16x32xf32>
    %7 = arith.mulf %6, %6 : vector<16x32xf32>
    %cst_2 = arith.constant dense<0.000000e+00> : vector<16xf32>
    %8 = vector.multi_reduction <add>, %7, %cst_2 [1] : vector<16x32xf32> to vector<16xf32>
    %9 = vector.shape_cast %8 : vector<16xf32> to vector<16x1xf32>
    %cst_3 = arith.constant 3.100000e+01 : f32
    %10 = vector.broadcast %cst_3 : f32 to vector<16x1xf32>
    %11 = arith.divf %9, %10 : vector<16x1xf32>
    %12 = math.sqrt %11 : vector<16x1xf32>
    %cst_4 = arith.constant 9.99999996E-13 : f32
    %13 = vector.broadcast %cst_4 : f32 to vector<16x1xf32>
    %14 = arith.addf %12, %13 : vector<16x1xf32>
    %cst_5 = arith.constant 1.000000e+00 : f32
    %15 = vector.broadcast %cst_5 : f32 to vector<16x1xf32>
    %16 = arith.divf %15, %14 : vector<16x1xf32>
    %17 = vector.broadcast %16 : vector<16x1xf32> to vector<16x32xf32>
    %18 = arith.mulf %6, %17 : vector<16x32xf32>
    %c0_6 = arith.constant 0 : index
    %c0_7 = arith.constant 0 : index
    %19 = vector.load %arg2[%c0_6, %c0_7] : memref<1x32xf32, #tpu.memory_space<vmem>>, vector<1x32xf32>
    %20 = vector.broadcast %19 : vector<1x32xf32> to vector<16x32xf32>
    %21 = arith.mulf %18, %20 : vector<16x32xf32>
    %c0_8 = arith.constant 0 : index
    %c0_9 = arith.constant 0 : index
    %22 = vector.load %arg3[%c0_8, %c0_9] : memref<1x32xf32, #tpu.memory_space<vmem>>, vector<1x32xf32>
    %23 = vector.broadcast %22 : vector<1x32xf32> to vector<16x32xf32>
    %24 = arith.addf %21, %23 : vector<16x32xf32>
    %c0_10 = arith.constant 0 : index
    %c0_11 = arith.constant 0 : index
    %25 = vector.load %arg4[%c0_10, %c0_11] : memref<16x32xf32, #tpu.memory_space<vmem>>, vector<16x32xf32>
    tpu.vector_store %arg4[%c0_10, %c0_11], %24 {strides = array<i32>} : memref<16x32xf32, #tpu.memory_space<vmem>>, vector<16x32xf32>,
    return
  }
  func.func @transform_0(%arg0: i32) -> (i32, i32) {
    %c0_i32 = arith.constant 0 : i32
    %c0_i32_0 = arith.constant 0 : i32
    return %arg0, %c0_i32 : i32, i32
  }
  func.func @transform_1(%arg0: i32) -> (i32, i32) {
    %c0_i32 = arith.constant 0 : i32
    %c0_i32_0 = arith.constant 0 : i32
    %c0_i32_1 = arith.constant 0 : i32
    return %c0_i32, %c0_i32_0 : i32, i32
  }
  func.func @transform_2(%arg0: i32) -> (i32, i32) {
    %c0_i32 = arith.constant 0 : i32
    %c0_i32_0 = arith.constant 0 : i32
    %c0_i32_1 = arith.constant 0 : i32
    return %c0_i32, %c0_i32_0 : i32, i32
  }
  func.func @transform_3(%arg0: i32) -> (i32, i32) {
    %c0_i32 = arith.constant 0 : i32
    %c0_i32_0 = arith.constant 0 : i32
    return %arg0, %c0_i32 : i32, i32
  }
}

</mosaic_0001>

<llo_original>
// kernel: tpu_custom_call.1
$region0: #{tpu_custom_call.1}
  #allocation0 [shape = 'u32[]', space=smem, size = 0x4, offset = 0x4, fixed_abs, tag = 'smem constant byte address 0x4 - core index']
  #allocation1 [shape = 'u32[72,128]{1,0:T(1,128)}', space=vmem, size = 0x9000, scoped, tag = 'internal scratch']
  %s0 = inlined_call_operand.hbm [shape: f32[16,32], index: 0, kind: input, shape index: {}]
  %s1 = inlined_call_operand.hbm [shape: f32[1,32], index: 1, kind: input, shape index: {}]
  %s2 = inlined_call_operand.vmem [shape: f32[1,32], index: 2, kind: input, shape index: {}]
  %s3 = inlined_call_operand.hbm [shape: f32[16,32], index: 3, kind: output, shape index: {}]
  %s4 = sld [smem:[#allocation0]]
  $region30: #{tpu_custom_call.1} parent=0
    _
  %s6 = ssub.s32 1, %s4
  %s7 = scalar_select 0, %s6, %s4
  $region1: #{tpu_custom_call.1} parent=0
    #allocation2 [shape = 'u8[8192]{0}', space=vmem, size = 0x2000, scoped, tag = 'input window, operand 0, single buffered']
    #allocation3 [shape = 's32[1]{0}', space=sflag, size = 0x4, scoped, tag = 'scoped memory for tpu_custom_call.1']
    #allocation4 [shape = 's32[1]{0}', space=sflag, size = 0x4, scoped, tag = 'scoped memory for tpu_custom_call.1']
    #allocation5 [shape = 'u8[512]{0}', space=vmem, size = 0x400, scoped, tag = 'input window, operand 1, single buffered']
    #allocation6 [shape = 's32[1]{0}', space=sflag, size = 0x4, scoped, tag = 'scoped memory for tpu_custom_call.1']
    #allocation7 [shape = 'u8[8192]{0}', space=vmem, size = 0x2000, scoped, tag = 'output window, operand 0, single buffered']
    %8 = vsyncpa [#allocation3], 0
    %9 = vsyncpa [#allocation6], 0
    %10 = vsyncpa [#allocation4], 0
    // Predicated region
    $region2: #{tpu_custom_call.1} parent=1 // pred_check
      _
    $region3: #{tpu_custom_call.1} parent=1 // pred_check_branch
      %12 = sbr.rel (0) target = $region5
    $region4: #{tpu_custom_call.1} parent=1 // pred_region
      %14 = vsyncadd [#allocation3], 0
      %s15 = sshll.u32 %s0, 4
      %s16 = int_to_ptr.hbm [resolvable:$true] %s15
      %s17 = sshll.u32 [#allocation2], 4
      %s18 = int_to_ptr.vmem [resolvable:$true] %s17
      %23 = dma.hbm_to_vmem [thread:$0]  %s16, 256, %s18, [#allocation3], 128, 128, 8
    $region5: #{tpu_custom_call.1} parent=1 // pred_fallthru
      _
    // Predicated region
    $region6: #{tpu_custom_call.1} parent=1 // pred_check
      _
    $region7: #{tpu_custom_call.1} parent=1 // pred_check_branch
      %25 = sbr.rel (0) target = $region9
    $region8: #{tpu_custom_call.1} parent=1 // pred_region
      %27 = vsyncadd [#allocation6], 0
      %s29 = sshll.u32 %s1, 4
      %s30 = int_to_ptr.hbm [resolvable:$true] %s29
      %s31 = sshll.u32 [#allocation5], 4
      %s32 = int_to_ptr.vmem [resolvable:$true] %s31
      %34 = dma.hbm_to_vmem [thread:$0]  %s30, 16, %s32, [#allocation6]
    $region9: #{tpu_custom_call.1} parent=1 // pred_fallthru
      _
    // Predicated region
    $region10: #{tpu_custom_call.1} parent=1 // pred_check
      _
    $region11: #{tpu_custom_call.1} parent=1 // pred_check_branch
      %36 = sbr.rel (0) target = $region13
    $region12: #{tpu_custom_call.1} parent=1 // pred_region
      _
    $region13: #{tpu_custom_call.1} parent=1 // pred_fallthru
      _
    // Predicated region
    $region14: #{tpu_custom_call.1} parent=1 // pred_check
      _
    $region15: #{tpu_custom_call.1} parent=1 // pred_check_branch
      %38 = sbr.rel (0) target = $region17
    $region16: #{tpu_custom_call.1} parent=1 // pred_region
      %40 = dma.done [#allocation3], 256
    $region17: #{tpu_custom_call.1} parent=1 // pred_fallthru
      _
    // Predicated region
    $region18: #{tpu_custom_call.1} parent=1 // pred_check
      _
    $region19: #{tpu_custom_call.1} parent=1 // pred_check_branch
      %42 = sbr.rel (0) target = $region21
    $region20: #{tpu_custom_call.1} parent=1 // pred_region
      %44 = dma.done [#allocation6], 16
    $region21: #{tpu_custom_call.1} parent=1 // pred_fallthru
      _
    %v45 = vld [vmem:[#allocation2] sm:$0xff]
    %v46 = vld [vmem:[#allocation2 + $0x8] sm:$0xff]
    %vm47 = vcmask 261120
    %v48 = vsel %vm47, %v45, 0.0
    %49 = vadd.xlane.f32.xlu0 %v48
    %v50 = vpop.xlane.xlu0 %49
    %v51 = vsel %vm47, %v46, 0.0
    %52 = vadd.xlane.f32.xlu0 %v51
    %v53 = vpop.xlane.xlu0 %52
    %v54 = vrcp.pop 32.0
    %v55 = vmul.f32 32.0, %v54
    %v56 = vsub.f32 1.0, %v55
    %v57 = vmul.f32 %v54, %v56
    %v58 = vadd.f32 %v54, %v57
    %vm59 = vweird.f32 %v54
    %v60 = vsel %vm59, %v54, %v58
    %v61 = vmul.f32 %v50, %v60
    %v62 = vmul.f32 %v53, %v60
    %v63 = vsub.f32 %v45, %v61
    %v64 = vsub.f32 %v46, %v62
    %v65 = vmul.f32 %v63, %v63
    %v66 = vmul.f32 %v64, %v64
    %v67 = vsel %vm47, %v65, 0.0
    %68 = vadd.xlane.f32.xlu0 %v67
    %v69 = vpop.xlane.xlu0 %68
    %v70 = vsel %vm47, %v66, 0.0
    %71 = vadd.xlane.f32.xlu0 %v70
    %v72 = vpop.xlane.xlu0 %71
    %v73 = vrcp.pop 31.0
    %v74 = vmul.f32 31.0, %v73
    %v75 = vsub.f32 1.0, %v74
    %v76 = vmul.f32 %v73, %v75
    %v77 = vadd.f32 %v73, %v76
    %vm78 = vweird.f32 %v73
    %v79 = vsel %vm78, %v73, %v77
    %v80 = vmul.f32 %v69, %v79
    %v81 = vmul.f32 %v72, %v79
    %v82 = vrsqrt.pop %v80
    %v83 = vmul.f32 %v82, %v80
    %v84 = vmul.f32 %v83, %v82
    %v85 = vmul.f32 0.5, %v84
    %v86 = vsub.f32 1.5, %v85
    %v87 = vmul.f32 %v82, %v86
    %v88 = vmul.f32 %v80, %v87
    %vm89 = vcmp.eq.f32.partialorder %v80, inf
    %v90 = vsel %vm89, %v80, %v88
    %vm91 = vcmp.eq.f32.partialorder %v80, 0.0
    %v92 = vand.u32 %v80, 2147483648
    %v93 = vsel %vm91, %v92, %v90
    %v94 = vrsqrt.pop %v81
    %v95 = vmul.f32 %v94, %v81
    %v96 = vmul.f32 %v95, %v94
    %v97 = vmul.f32 0.5, %v96
    %v98 = vsub.f32 1.5, %v97
    %v99 = vmul.f32 %v94, %v98
    %v100 = vmul.f32 %v81, %v99
    %vm101 = vcmp.eq.f32.partialorder %v81, inf
    %v102 = vsel %vm101, %v81, %v100
    %vm103 = vcmp.eq.f32.partialorder %v81, 0.0
    %v104 = vand.u32 %v81, 2147483648
    %v105 = vsel %vm103, %v104, %v102
    %v106 = vadd.f32 %v93, 1e-12
    %v107 = vadd.f32 %v105, 1e-12
    %v108 = vrcp.pop %v106
    %v109 = vmul.f32 %v106, %v108
    %v110 = vsub.f32 1.0, %v109
    %v111 = vmul.f32 %v108, %v110
    %v112 = vadd.f32 %v108, %v111
    %vm113 = vweird.f32 %v106
    %vm114 = vweird.f32 %v108
    %vm115 = vmor %vm113, %vm114
    %v116 = vsel %vm115, %v108, %v112
    %v117 = vand.u32 2147483647, %v106
    %vm118 = vcmp.eq.f32.partialorder %v117, 8.507059e+37
    %v119 = vand.u32 %v106, 2147483648
    %v120 = vor.u32 1.1754944e-38, %v119
    %v121 = vsel %vm118, %v120, %v116
    %v122 = vmul.f32 1.0, %v121
    %v123 = vrcp.pop %v107
    %v124 = vmul.f32 %v107, %v123
    %v125 = vsub.f32 1.0, %v124
    %v126 = vmul.f32 %v123, %v125
    %v127 = vadd.f32 %v123, %v126
    %vm128 = vweird.f32 %v107
    %vm129 = vweird.f32 %v123
    %vm130 = vmor %vm128, %vm129
    %v131 = vsel %vm130, %v123, %v127
    %v132 = vand.u32 2147483647, %v107
    %vm133 = vcmp.eq.f32.partialorder %v132, 8.507059e+37
    %v134 = vand.u32 %v107, 2147483648
    %v135 = vor.u32 1.1754944e-38, %v134
    %v136 = vsel %vm133, %v135, %v131
    %v137 = vmul.f32 1.0, %v136
    %v138 = vmul.f32 %v63, %v122
    %v139 = vmul.f32 %v64, %v137
    %v140 = vld [vmem:[#allocation5] sm:$0x1]
    %v142 = vperm.slane %v140, 0
    %v144 = vmul.f32 %v138, %v142
    %v145 = vmul.f32 %v139, %v142
    %v146 = vld [vmem:[%s2] sm:$0x1]
    %v148 = vperm.slane %v146, 0
    %v150 = vadd.f32 %v144, %v148
    %v151 = vadd.f32 %v145, %v148
    %152 = vst.msk [vmem:[#allocation7] sm:$0xff] %vm47, %v150
    %153 = vst.msk [vmem:[#allocation7 + $0x8] sm:$0xff] %vm47, %v151
    // Predicated region
    $region22: #{tpu_custom_call.1} parent=1 // pred_check
      _
    $region23: #{tpu_custom_call.1} parent=1 // pred_check_branch
      %155 = sbr.rel (0) target = $region25
    $region24: #{tpu_custom_call.1} parent=1 // pred_region
      %157 = vsyncadd [#allocation4], 0
      %s158 = sshll.u32 [#allocation7], 4
      %s159 = int_to_ptr.vmem [resolvable:$true] %s158
      %s160 = sshll.u32 %s3, 4
      %s161 = int_to_ptr.hbm [resolvable:$true] %s160
      %166 = dma.vmem_to_hbm [thread:$0]  %s159, 256, %s161, [#allocation4], 128, 128, 8
    $region25: #{tpu_custom_call.1} parent=1 // pred_fallthru
      _
    // Predicated region
    $region26: #{tpu_custom_call.1} parent=1 // pred_check
      _
    $region27: #{tpu_custom_call.1} parent=1 // pred_check_branch
      %168 = sbr.rel (0) target = $region29
    $region28: #{tpu_custom_call.1} parent=1 // pred_region
      %170 = dma.done [#allocation4], 256
    $region29: #{tpu_custom_call.1} parent=1 // pred_fallthru
      _
    %171 = vsyncpa [#allocation3], 1
    %172 = vsyncpa [#allocation6], 1
    %173 = vsyncpa [#allocation4], 1

</llo_original>
